<compile_context>
chip_gen: v6e
topology: v6e:2x2x1
jax: 0.10.0
libtpu: 0.0.40
codegen_flags: <defaults>
</compile_context>

<pallas_src>
import jax
import jax.numpy as jnp
from jax import lax
from jax.experimental import pallas as pl
from jax.experimental.pallas import tpu as pltpu


def _round_up(x, m):
    return ((x + m - 1) // m) * m


def _make_kernel(alpha, tchunk):
    """Build the kernel body with static leak coefficient and chunk length."""
    alpha = float(alpha)
    skip_blend = (alpha == 1.0)

    def kernel(x_ref, w_in_ref, b_ref, w_hh_ref, w_fc_ref, b_fc_ref,
               out_ref, rnn_out_ref, h_scratch, xw_scratch):
        # Zero-init the hidden carry at the first time-chunk of each batch block
        # (CTRNN.init_hidden).
        @pl.when(pl.program_id(1) == 0)
        def _():
            h_scratch[...] = jnp.zeros_like(h_scratch)

        tb, bb, ip = x_ref.shape          # (TCHUNK, B_block, I_pad)
        hp = w_in_ref.shape[1]            # H_pad
        op = w_fc_ref.shape[1]            # O_pad

        # ---- (1) Batched input projection for the whole chunk: one MXU matmul.
        #      xw = x @ W_in + (b_in + b_hh)   (biases fused in the wrapper)
        x2d = x_ref[...].reshape(tb * bb, ip)
        xw = (jnp.dot(x2d, w_in_ref[...], preferred_element_type=jnp.float32)
              + b_ref[...])
        xw_scratch[...] = xw.reshape(tb, bb, hp)

        # ---- (2) Sequential recurrence: only h @ W_hh stays on the serial path.
        w_hh = w_hh_ref[...]

        def step(t, h):
            pre = xw_scratch[t] + jnp.dot(h, w_hh,
                                          preferred_element_type=jnp.float32)
            h_relu = jnp.maximum(pre, 0.0)
            if skip_blend:                     # alpha == 1 (dt=None default)
                h_new = h_relu
            else:
                h_new = h * (1.0 - alpha) + h_relu * alpha
            rnn_out_ref[t] = h_new.astype(rnn_out_ref.dtype)
            return h_new

        h_final = lax.fori_loop(0, tchunk, step, h_scratch[...], unroll=True)
        h_scratch[...] = h_final

        # ---- (3) Batched output head for the whole chunk: one MXU matmul.
        r2d = rnn_out_ref[...].reshape(tb * bb, hp)
        y = (jnp.dot(r2d, w_fc_ref[...], preferred_element_type=jnp.float32)
             + b_fc_ref[...])
        out_ref[...] = y.reshape(tb, bb, op).astype(out_ref.dtype)

    return kernel


def ctrnn_plus_output(x, params, alpha=1.0, *, time_chunk=8, batch_block=None):
    """Forward pass.

    Args:
      x: (T, B, I) float32
      params: dict with
        w_in (I, H), b_in (H,)
        w_hh (H, H), b_hh (H,)
        w_fc (H, O), b_fc (O,)
      alpha: dt / tau (PyTorch default dt=None -> alpha = 1)
      time_chunk: timesteps processed per grid step.
      batch_block: rows of (padded) batch per grid block; multiple of 8.
        Default = full padded batch. Set to B_pad // 2 to shard the batch
        across v7x's two TensorCores.

    Returns:
      out:        (T, B, O)
      rnn_output: (T, B, H)
    """
    T, B, I = x.shape
    H = params["w_in"].shape[1]
    O = params["w_fc"].shape[1]
    f32 = jnp.float32

    # Lane/sublane-friendly padding: features -> 128 lanes, batch -> 8 sublanes.
    I_pad = _round_up(I, 128)
    H_pad = _round_up(H, 128)
    O_pad = _round_up(O, 128)
    B_pad = _round_up(B, 8)

    tchunk = max(1, min(int(time_chunk), T))
    n_tc = pl.cdiv(T, tchunk)
    T_pad = n_tc * tchunk

    if batch_block is None:
        batch_block = B_pad
    assert batch_block % 8 == 0 and B_pad % batch_block == 0
    n_bb = B_pad // batch_block

    # Zero-padded operands (zero padding is exact; sliced off at the end).
    x_p = jnp.zeros((T_pad, B_pad, I_pad), f32).at[:T, :B, :I].set(x.astype(f32))
    w_in = jnp.zeros((I_pad, H_pad), f32).at[:I, :H].set(params["w_in"].astype(f32))
    w_hh = jnp.zeros((H_pad, H_pad), f32).at[:H, :H].set(params["w_hh"].astype(f32))
    w_fc = jnp.zeros((H_pad, O_pad), f32).at[:H, :O].set(params["w_fc"].astype(f32))
    b_h = jnp.zeros((1, H_pad), f32).at[0, :H].set(
        (params["b_in"] + params["b_hh"]).astype(f32))      # fused recurrent bias
    b_fc = jnp.zeros((1, O_pad), f32).at[0, :O].set(params["b_fc"].astype(f32))

    kernel = _make_kernel(alpha, tchunk)

    grid_spec = pltpu.PrefetchScalarGridSpec(
        num_scalar_prefetch=0,
        grid=(n_bb, n_tc),                                   # (batch blocks, time chunks)
        in_specs=[
            pl.BlockSpec((tchunk, batch_block, I_pad), lambda b, c: (c, b, 0)),  # x chunk
            pl.BlockSpec((I_pad, H_pad), lambda b, c: (0, 0)),                   # w_in
            pl.BlockSpec((1, H_pad), lambda b, c: (0, 0)),                       # b_in+b_hh
            pl.BlockSpec((H_pad, H_pad), lambda b, c: (0, 0)),                   # w_hh
            pl.BlockSpec((H_pad, O_pad), lambda b, c: (0, 0)),                   # w_fc
            pl.BlockSpec((1, O_pad), lambda b, c: (0, 0)),                       # b_fc
        ],
        out_specs=[
            pl.BlockSpec((tchunk, batch_block, O_pad), lambda b, c: (c, b, 0)),  # out
            pl.BlockSpec((tchunk, batch_block, H_pad), lambda b, c: (c, b, 0)),  # rnn_out
        ],
        scratch_shapes=[
            pltpu.VMEM((batch_block, H_pad), f32),           # hidden-state carry
            pltpu.VMEM((tchunk, batch_block, H_pad), f32),   # per-chunk input projection
        ],
    )

    out_p, rnn_p = pl.pallas_call(
        kernel,
        out_shape=(
            jax.ShapeDtypeStruct((T_pad, B_pad, O_pad), f32),
            jax.ShapeDtypeStruct((T_pad, B_pad, H_pad), f32),
        ),
        grid_spec=grid_spec,
        compiler_params=pltpu.CompilerParams(
            # batch blocks are independent (megacore-shardable on v7x);
            # the time recurrence must run sequentially.
            dimension_semantics=("parallel", "arbitrary"),
        ),
    )(x_p, w_in, b_h, w_hh, w_fc, b_fc)

    return out_p[:T, :B, :O], rnn_p[:T, :B, :H]


def _reference(x, params, alpha=1.0):
    """Pure-JAX reference mirroring the PyTorch module."""
    T, B, I = x.shape
    H = params["w_in"].shape[1]

    def step(h, x_t):
        pre = (x_t @ params["w_in"] + params["b_in"]
               + h @ params["w_hh"] + params["b_hh"])
        h_relu = jnp.maximum(pre, 0.0)
        h_new = h * (1.0 - alpha) + h_relu * alpha
        return h_new, h_new

    h0 = jnp.zeros((B, H), jnp.float32)
    _, rnn_out = jax.lax.scan(step, h0, x)
    out = rnn_out @ params["w_fc"] + params["b_fc"]
    return out, rnn_out


def _init_params(key, input_size, hidden_size, output_size):
    """Deterministic init mimicking nn.Linear (uniform +/- 1/sqrt(fan_in))."""
    ks = jax.random.split(key, 6)

    def lin(kw, kb, fan_in, fan_out):
        bound = 1.0 / (fan_in ** 0.5)
        w = jax.random.uniform(kw, (fan_in, fan_out), jnp.float32, -bound, bound)
        b = jax.random.uniform(kb, (fan_out,), jnp.float32, -bound, bound)
        return w, b

    w_in, b_in = lin(ks[0], ks[1], input_size, hidden_size)
    w_hh, b_hh = lin(ks[2], ks[3], hidden_size, hidden_size)
    w_fc, b_fc = lin(ks[4], ks[5], hidden_size, output_size)
    return dict(w_in=w_in, b_in=b_in, w_hh=w_hh, b_hh=b_hh, w_fc=w_fc, b_fc=b_fc)


if __name__ == "__main__":
    # Small shapes consistent with the module: x is (seq_len, batch, input_size)
    T, B, I, H, O = 8, 4, 16, 32, 8

    key = jax.random.PRNGKey(0)
    k_x, k_p = jax.random.split(key)
    x = jax.random.normal(k_x, (T, B, I), jnp.float32)
    params = _init_params(k_p, I, H, O)

    # PyTorch default: dt=None -> alpha = 1
    alpha = 1.0

    out, rnn_out = ctrnn_plus_output(x, params, alpha=alpha, time_chunk=8)
    jax.block_until_ready((out, rnn_out))

    ref_out, ref_rnn = _reference(x, params, alpha=alpha)
    assert out.shape == (T, B, O) and rnn_out.shape == (T, B, H)
    assert jnp.allclose(out, ref_out, atol=1e-5, rtol=1e-5)
    assert jnp.allclose(rnn_out, ref_rnn, atol=1e-5, rtol=1e-5)

    print("KERNEL_OK")
</pallas_src>

<mosaic_0001>
module attributes {stable_mosaic.version = 11 : i64} {
  func.func @kernel(%arg0: i32, %arg1: i32, %arg2: memref<8x8x128xf32, #tpu.memory_space<vmem>>, %arg3: memref<128x128xf32, #tpu.memory_space<vmem>>, %arg4: memref<1x128xf32, #tpu.memory_space<vmem>>, %arg5: memref<128x128xf32, #tpu.memory_space<vmem>>, %arg6: memref<128x128xf32, #tpu.memory_space<vmem>>, %arg7: memref<1x128xf32, #tpu.memory_space<vmem>>, %arg8: memref<8x8x128xf32, #tpu.memory_space<vmem>>, %arg9: memref<8x8x128xf32, #tpu.memory_space<vmem>>, %arg10: memref<8x128xf32, #tpu.memory_space<vmem>>, %arg11: memref<8x8x128xf32, #tpu.memory_space<vmem>>) attributes {dimension_semantics = [#tpu.dimension_semantics<parallel>, #tpu.dimension_semantics<arbitrary>], iteration_bounds = array<i64: 1, 1>, scalar_prefetch = 0 : i64, scratch_operands = 2 : i64, tpu.core_type = #tpu.core_type<tc>, window_params = [{transform_indices = @transform_0, window_bounds = array<i64: 8, 8, 128>}, {pipeline_mode = #tpu.pipeline_mode<synchronous>, transform_indices = @transform_1, window_bounds = array<i64: 128, 128>}, {pipeline_mode = #tpu.pipeline_mode<synchronous>, transform_indices = @transform_2, window_bounds = array<i64: 1, 128>}, {pipeline_mode = #tpu.pipeline_mode<synchronous>, transform_indices = @transform_3, window_bounds = array<i64: 128, 128>}, {pipeline_mode = #tpu.pipeline_mode<synchronous>, transform_indices = @transform_4, window_bounds = array<i64: 128, 128>}, {pipeline_mode = #tpu.pipeline_mode<synchronous>, transform_indices = @transform_5, window_bounds = array<i64: 1, 128>}, {transform_indices = @transform_6, window_bounds = array<i64: 8, 8, 128>}, {transform_indices = @transform_7, window_bounds = array<i64: 8, 8, 128>}]} {
    %c0_i32 = arith.constant 0 : i32
    %0 = arith.cmpi eq, %arg1, %c0_i32 : i32
    %1 = arith.extui %0 : i1 to i32
    %c0_i32_0 = arith.constant 0 : i32
    %2 = arith.cmpi ne, %1, %c0_i32_0 : i32
    scf.if %2 {
      %cst_76 = arith.constant 0.000000e+00 : f32
      %112 = vector.broadcast %cst_76 : f32 to vector<8x128xf32>
      %c0_77 = arith.constant 0 : index
      %c0_78 = arith.constant 0 : index
      %113 = vector.load %arg10[%c0_77, %c0_78] : memref<8x128xf32, #tpu.memory_space<vmem>>, vector<8x128xf32>
      tpu.vector_store %arg10[%c0_77, %c0_78], %112 {strides = array<i32>} : memref<8x128xf32, #tpu.memory_space<vmem>>, vector<8x128xf32>,
    } else {
    }
    %c0 = arith.constant 0 : index
    %c0_1 = arith.constant 0 : index
    %c0_2 = arith.constant 0 : index
    %3 = vector.load %arg2[%c0, %c0_1, %c0_2] : memref<8x8x128xf32, #tpu.memory_space<vmem>>, vector<8x8x128xf32>
    %4 = vector.shape_cast %3 : vector<8x8x128xf32> to vector<64x128xf32>
    %c0_3 = arith.constant 0 : index
    %c0_4 = arith.constant 0 : index
    %5 = vector.load %arg3[%c0_3, %c0_4] : memref<128x128xf32, #tpu.memory_space<vmem>>, vector<128x128xf32>
    %cst = arith.constant dense<0.000000e+00> : vector<64x128xf32>
    %6 = tpu.matmul %4, %5, %cst {dimension_numbers = #tpu.dot_dimension_numbers<[1], [0], [0], [1], [0, 0, 1, 1], [], []>} : vector<64x128xf32>, vector<128x128xf32>, vector<64x128xf32> -> vector<64x128xf32>
    %c0_5 = arith.constant 0 : index
    %c0_6 = arith.constant 0 : index
    %7 = vector.load %arg4[%c0_5, %c0_6] : memref<1x128xf32, #tpu.memory_space<vmem>>, vector<1x128xf32>
    %8 = vector.broadcast %7 : vector<1x128xf32> to vector<64x128xf32>
    %9 = arith.addf %6, %8 : vector<64x128xf32>
    %10 = vector.shape_cast %9 : vector<64x128xf32> to vector<8x8x128xf32>
    %c0_7 = arith.constant 0 : index
    %c0_8 = arith.constant 0 : index
    %c0_9 = arith.constant 0 : index
    %11 = vector.load %arg11[%c0_7, %c0_8, %c0_9] : memref<8x8x128xf32, #tpu.memory_space<vmem>>, vector<8x8x128xf32>
    tpu.vector_store %arg11[%c0_7, %c0_8, %c0_9], %10 {strides = array<i32>} : memref<8x8x128xf32, #tpu.memory_space<vmem>>, vector<8x8x128xf32>,
    %c0_10 = arith.constant 0 : index
    %c0_11 = arith.constant 0 : index
    %12 = vector.load %arg5[%c0_10, %c0_11] : memref<128x128xf32, #tpu.memory_space<vmem>>, vector<128x128xf32>
    %c0_12 = arith.constant 0 : index
    %c0_13 = arith.constant 0 : index
    %13 = vector.load %arg10[%c0_12, %c0_13] : memref<8x128xf32, #tpu.memory_space<vmem>>, vector<8x128xf32>
    %c0_i32_14 = arith.constant 0 : i32
    %14 = arith.index_cast %c0_i32_14 : i32 to index
    %c0_15 = arith.constant 0 : index
    %c0_16 = arith.constant 0 : index
    %15 = vector.load %arg11[%14, %c0_15, %c0_16] : memref<8x8x128xf32, #tpu.memory_space<vmem>>, vector<1x8x128xf32>
    %16 = vector.shape_cast %15 : vector<1x8x128xf32> to vector<8x128xf32>
    %cst_17 = arith.constant dense<0.000000e+00> : vector<8x128xf32>
    %17 = tpu.matmul %13, %12, %cst_17 {dimension_numbers = #tpu.dot_dimension_numbers<[1], [0], [0], [1], [0, 0, 1, 1], [], []>} : vector<8x128xf32>, vector<128x128xf32>, vector<8x128xf32> -> vector<8x128xf32>
    %18 = arith.addf %16, %17 : vector<8x128xf32>
    %cst_18 = arith.constant 0.000000e+00 : f32
    %19 = vector.broadcast %cst_18 : f32 to vector<8x128xf32>
    %20 = arith.maximumf %18, %19 : vector<8x128xf32>
    %21 = arith.index_cast %c0_i32_14 : i32 to index
    %c0_19 = arith.constant 0 : index
    %c0_20 = arith.constant 0 : index
    %22 = vector.load %arg9[%21, %c0_19, %c0_20] : memref<8x8x128xf32, #tpu.memory_space<vmem>>, vector<1x8x128xf32>
    %23 = vector.shape_cast %22 : vector<1x8x128xf32> to vector<8x128xf32>
    %24 = vector.shape_cast %20 : vector<8x128xf32> to vector<1x8x128xf32>
    tpu.vector_store %arg9[%21, %c0_19, %c0_20], %24 {strides = array<i32>} : memref<8x8x128xf32, #tpu.memory_space<vmem>>, vector<1x8x128xf32>,
    %c1_i32 = arith.constant 1 : i32
    %25 = arith.index_cast %c1_i32 : i32 to index
    %c0_21 = arith.constant 0 : index
    %c0_22 = arith.constant 0 : index
    %26 = vector.load %arg11[%25, %c0_21, %c0_22] : memref<8x8x128xf32, #tpu.memory_space<vmem>>, vector<1x8x128xf32>
    %27 = vector.shape_cast %26 : vector<1x8x128xf32> to vector<8x128xf32>
    %cst_23 = arith.constant dense<0.000000e+00> : vector<8x128xf32>
    %28 = tpu.matmul %20, %12, %cst_23 {dimension_numbers = #tpu.dot_dimension_numbers<[1], [0], [0], [1], [0, 0, 1, 1], [], []>} : vector<8x128xf32>, vector<128x128xf32>, vector<8x128xf32> -> vector<8x128xf32>
    %29 = arith.addf %27, %28 : vector<8x128xf32>
    %cst_24 = arith.constant 0.000000e+00 : f32
    %30 = vector.broadcast %cst_24 : f32 to vector<8x128xf32>
    %31 = arith.maximumf %29, %30 : vector<8x128xf32>
    %32 = arith.index_cast %c1_i32 : i32 to index
    %c0_25 = arith.constant 0 : index
    %c0_26 = arith.constant 0 : index
    %33 = vector.load %arg9[%32, %c0_25, %c0_26] : memref<8x8x128xf32, #tpu.memory_space<vmem>>, vector<1x8x128xf32>
    %34 = vector.shape_cast %33 : vector<1x8x128xf32> to vector<8x128xf32>
    %35 = vector.shape_cast %31 : vector<8x128xf32> to vector<1x8x128xf32>
    tpu.vector_store %arg9[%32, %c0_25, %c0_26], %35 {strides = array<i32>} : memref<8x8x128xf32, #tpu.memory_space<vmem>>, vector<1x8x128xf32>,
    %c2_i32 = arith.constant 2 : i32
    %36 = arith.index_cast %c2_i32 : i32 to index
    %c0_27 = arith.constant 0 : index
    %c0_28 = arith.constant 0 : index
    %37 = vector.load %arg11[%36, %c0_27, %c0_28] : memref<8x8x128xf32, #tpu.memory_space<vmem>>, vector<1x8x128xf32>
    %38 = vector.shape_cast %37 : vector<1x8x128xf32> to vector<8x128xf32>
    %cst_29 = arith.constant dense<0.000000e+00> : vector<8x128xf32>
    %39 = tpu.matmul %31, %12, %cst_29 {dimension_numbers = #tpu.dot_dimension_numbers<[1], [0], [0], [1], [0, 0, 1, 1], [], []>} : vector<8x128xf32>, vector<128x128xf32>, vector<8x128xf32> -> vector<8x128xf32>
    %40 = arith.addf %38, %39 : vector<8x128xf32>
    %cst_30 = arith.constant 0.000000e+00 : f32
    %41 = vector.broadcast %cst_30 : f32 to vector<8x128xf32>
    %42 = arith.maximumf %40, %41 : vector<8x128xf32>
    %43 = arith.index_cast %c2_i32 : i32 to index
    %c0_31 = arith.constant 0 : index
    %c0_32 = arith.constant 0 : index
    %44 = vector.load %arg9[%43, %c0_31, %c0_32] : memref<8x8x128xf32, #tpu.memory_space<vmem>>, vector<1x8x128xf32>
    %45 = vector.shape_cast %44 : vector<1x8x128xf32> to vector<8x128xf32>
    %46 = vector.shape_cast %42 : vector<8x128xf32> to vector<1x8x128xf32>
    tpu.vector_store %arg9[%43, %c0_31, %c0_32], %46 {strides = array<i32>} : memref<8x8x128xf32, #tpu.memory_space<vmem>>, vector<1x8x128xf32>,
    %c3_i32 = arith.constant 3 : i32
    %47 = arith.index_cast %c3_i32 : i32 to index
    %c0_33 = arith.constant 0 : index
    %c0_34 = arith.constant 0 : index
    %48 = vector.load %arg11[%47, %c0_33, %c0_34] : memref<8x8x128xf32, #tpu.memory_space<vmem>>, vector<1x8x128xf32>
    %49 = vector.shape_cast %48 : vector<1x8x128xf32> to vector<8x128xf32>
    %cst_35 = arith.constant dense<0.000000e+00> : vector<8x128xf32>
    %50 = tpu.matmul %42, %12, %cst_35 {dimension_numbers = #tpu.dot_dimension_numbers<[1], [0], [0], [1], [0, 0, 1, 1], [], []>} : vector<8x128xf32>, vector<128x128xf32>, vector<8x128xf32> -> vector<8x128xf32>
    %51 = arith.addf %49, %50 : vector<8x128xf32>
    %cst_36 = arith.constant 0.000000e+00 : f32
    %52 = vector.broadcast %cst_36 : f32 to vector<8x128xf32>
    %53 = arith.maximumf %51, %52 : vector<8x128xf32>
    %54 = arith.index_cast %c3_i32 : i32 to index
    %c0_37 = arith.constant 0 : index
    %c0_38 = arith.constant 0 : index
    %55 = vector.load %arg9[%54, %c0_37, %c0_38] : memref<8x8x128xf32, #tpu.memory_space<vmem>>, vector<1x8x128xf32>
    %56 = vector.shape_cast %55 : vector<1x8x128xf32> to vector<8x128xf32>
    %57 = vector.shape_cast %53 : vector<8x128xf32> to vector<1x8x128xf32>
    tpu.vector_store %arg9[%54, %c0_37, %c0_38], %57 {strides = array<i32>} : memref<8x8x128xf32, #tpu.memory_space<vmem>>, vector<1x8x128xf32>,
    %c4_i32 = arith.constant 4 : i32
    %58 = arith.index_cast %c4_i32 : i32 to index
    %c0_39 = arith.constant 0 : index
    %c0_40 = arith.constant 0 : index
    %59 = vector.load %arg11[%58, %c0_39, %c0_40] : memref<8x8x128xf32, #tpu.memory_space<vmem>>, vector<1x8x128xf32>
    %60 = vector.shape_cast %59 : vector<1x8x128xf32> to vector<8x128xf32>
    %cst_41 = arith.constant dense<0.000000e+00> : vector<8x128xf32>
    %61 = tpu.matmul %53, %12, %cst_41 {dimension_numbers = #tpu.dot_dimension_numbers<[1], [0], [0], [1], [0, 0, 1, 1], [], []>} : vector<8x128xf32>, vector<128x128xf32>, vector<8x128xf32> -> vector<8x128xf32>
    %62 = arith.addf %60, %61 : vector<8x128xf32>
    %cst_42 = arith.constant 0.000000e+00 : f32
    %63 = vector.broadcast %cst_42 : f32 to vector<8x128xf32>
    %64 = arith.maximumf %62, %63 : vector<8x128xf32>
    %65 = arith.index_cast %c4_i32 : i32 to index
    %c0_43 = arith.constant 0 : index
    %c0_44 = arith.constant 0 : index
    %66 = vector.load %arg9[%65, %c0_43, %c0_44] : memref<8x8x128xf32, #tpu.memory_space<vmem>>, vector<1x8x128xf32>
    %67 = vector.shape_cast %66 : vector<1x8x128xf32> to vector<8x128xf32>
    %68 = vector.shape_cast %64 : vector<8x128xf32> to vector<1x8x128xf32>
    tpu.vector_store %arg9[%65, %c0_43, %c0_44], %68 {strides = array<i32>} : memref<8x8x128xf32, #tpu.memory_space<vmem>>, vector<1x8x128xf32>,
    %c5_i32 = arith.constant 5 : i32
    %69 = arith.index_cast %c5_i32 : i32 to index
    %c0_45 = arith.constant 0 : index
    %c0_46 = arith.constant 0 : index
    %70 = vector.load %arg11[%69, %c0_45, %c0_46] : memref<8x8x128xf32, #tpu.memory_space<vmem>>, vector<1x8x128xf32>
    %71 = vector.shape_cast %70 : vector<1x8x128xf32> to vector<8x128xf32>
    %cst_47 = arith.constant dense<0.000000e+00> : vector<8x128xf32>
    %72 = tpu.matmul %64, %12, %cst_47 {dimension_numbers = #tpu.dot_dimension_numbers<[1], [0], [0], [1], [0, 0, 1, 1], [], []>} : vector<8x128xf32>, vector<128x128xf32>, vector<8x128xf32> -> vector<8x128xf32>
    %73 = arith.addf %71, %72 : vector<8x128xf32>
    %cst_48 = arith.constant 0.000000e+00 : f32
    %74 = vector.broadcast %cst_48 : f32 to vector<8x128xf32>
    %75 = arith.maximumf %73, %74 : vector<8x128xf32>
    %76 = arith.index_cast %c5_i32 : i32 to index
    %c0_49 = arith.constant 0 : index
    %c0_50 = arith.constant 0 : index
    %77 = vector.load %arg9[%76, %c0_49, %c0_50] : memref<8x8x128xf32, #tpu.memory_space<vmem>>, vector<1x8x128xf32>
    %78 = vector.shape_cast %77 : vector<1x8x128xf32> to vector<8x128xf32>
    %79 = vector.shape_cast %75 : vector<8x128xf32> to vector<1x8x128xf32>
    tpu.vector_store %arg9[%76, %c0_49, %c0_50], %79 {strides = array<i32>} : memref<8x8x128xf32, #tpu.memory_space<vmem>>, vector<1x8x128xf32>,
    %c6_i32 = arith.constant 6 : i32
    %80 = arith.index_cast %c6_i32 : i32 to index
    %c0_51 = arith.constant 0 : index
    %c0_52 = arith.constant 0 : index
    %81 = vector.load %arg11[%80, %c0_51, %c0_52] : memref<8x8x128xf32, #tpu.memory_space<vmem>>, vector<1x8x128xf32>
    %82 = vector.shape_cast %81 : vector<1x8x128xf32> to vector<8x128xf32>
    %cst_53 = arith.constant dense<0.000000e+00> : vector<8x128xf32>
    %83 = tpu.matmul %75, %12, %cst_53 {dimension_numbers = #tpu.dot_dimension_numbers<[1], [0], [0], [1], [0, 0, 1, 1], [], []>} : vector<8x128xf32>, vector<128x128xf32>, vector<8x128xf32> -> vector<8x128xf32>
    %84 = arith.addf %82, %83 : vector<8x128xf32>
    %cst_54 = arith.constant 0.000000e+00 : f32
    %85 = vector.broadcast %cst_54 : f32 to vector<8x128xf32>
    %86 = arith.maximumf %84, %85 : vector<8x128xf32>
    %87 = arith.index_cast %c6_i32 : i32 to index
    %c0_55 = arith.constant 0 : index
    %c0_56 = arith.constant 0 : index
    %88 = vector.load %arg9[%87, %c0_55, %c0_56] : memref<8x8x128xf32, #tpu.memory_space<vmem>>, vector<1x8x128xf32>
    %89 = vector.shape_cast %88 : vector<1x8x128xf32> to vector<8x128xf32>
    %90 = vector.shape_cast %86 : vector<8x128xf32> to vector<1x8x128xf32>
    tpu.vector_store %arg9[%87, %c0_55, %c0_56], %90 {strides = array<i32>} : memref<8x8x128xf32, #tpu.memory_space<vmem>>, vector<1x8x128xf32>,
    %c7_i32 = arith.constant 7 : i32
    %91 = arith.index_cast %c7_i32 : i32 to index
    %c0_57 = arith.constant 0 : index
    %c0_58 = arith.constant 0 : index
    %92 = vector.load %arg11[%91, %c0_57, %c0_58] : memref<8x8x128xf32, #tpu.memory_space<vmem>>, vector<1x8x128xf32>
    %93 = vector.shape_cast %92 : vector<1x8x128xf32> to vector<8x128xf32>
    %cst_59 = arith.constant dense<0.000000e+00> : vector<8x128xf32>
    %94 = tpu.matmul %86, %12, %cst_59 {dimension_numbers = #tpu.dot_dimension_numbers<[1], [0], [0], [1], [0, 0, 1, 1], [], []>} : vector<8x128xf32>, vector<128x128xf32>, vector<8x128xf32> -> vector<8x128xf32>
    %95 = arith.addf %93, %94 : vector<8x128xf32>
    %cst_60 = arith.constant 0.000000e+00 : f32
    %96 = vector.broadcast %cst_60 : f32 to vector<8x128xf32>
    %97 = arith.maximumf %95, %96 : vector<8x128xf32>
    %98 = arith.index_cast %c7_i32 : i32 to index
    %c0_61 = arith.constant 0 : index
    %c0_62 = arith.constant 0 : index
    %99 = vector.load %arg9[%98, %c0_61, %c0_62] : memref<8x8x128xf32, #tpu.memory_space<vmem>>, vector<1x8x128xf32>
    %100 = vector.shape_cast %99 : vector<1x8x128xf32> to vector<8x128xf32>
    %101 = vector.shape_cast %97 : vector<8x128xf32> to vector<1x8x128xf32>
    tpu.vector_store %arg9[%98, %c0_61, %c0_62], %101 {strides = array<i32>} : memref<8x8x128xf32, #tpu.memory_space<vmem>>, vector<1x8x128xf32>,
    %c8_i32 = arith.constant 8 : i32
    %c0_63 = arith.constant 0 : index
    %c0_64 = arith.constant 0 : index
    %102 = vector.load %arg10[%c0_63, %c0_64] : memref<8x128xf32, #tpu.memory_space<vmem>>, vector<8x128xf32>
    tpu.vector_store %arg10[%c0_63, %c0_64], %97 {strides = array<i32>} : memref<8x128xf32, #tpu.memory_space<vmem>>, vector<8x128xf32>,
    %c0_65 = arith.constant 0 : index
    %c0_66 = arith.constant 0 : index
    %c0_67 = arith.constant 0 : index
    %103 = vector.load %arg9[%c0_65, %c0_66, %c0_67] : memref<8x8x128xf32, #tpu.memory_space<vmem>>, vector<8x8x128xf32>
    %104 = vector.shape_cast %103 : vector<8x8x128xf32> to vector<64x128xf32>
    %c0_68 = arith.constant 0 : index
    %c0_69 = arith.constant 0 : index
    %105 = vector.load %arg6[%c0_68, %c0_69] : memref<128x128xf32, #tpu.memory_space<vmem>>, vector<128x128xf32>
    %cst_70 = arith.constant dense<0.000000e+00> : vector<64x128xf32>
    %106 = tpu.matmul %104, %105, %cst_70 {dimension_numbers = #tpu.dot_dimension_numbers<[1], [0], [0], [1], [0, 0, 1, 1], [], []>} : vector<64x128xf32>, vector<128x128xf32>, vector<64x128xf32> -> vector<64x128xf32>
    %c0_71 = arith.constant 0 : index
    %c0_72 = arith.constant 0 : index
    %107 = vector.load %arg7[%c0_71, %c0_72] : memref<1x128xf32, #tpu.memory_space<vmem>>, vector<1x128xf32>
    %108 = vector.broadcast %107 : vector<1x128xf32> to vector<64x128xf32>
    %109 = arith.addf %106, %108 : vector<64x128xf32>
    %110 = vector.shape_cast %109 : vector<64x128xf32> to vector<8x8x128xf32>
    %c0_73 = arith.constant 0 : index
    %c0_74 = arith.constant 0 : index
    %c0_75 = arith.constant 0 : index
    %111 = vector.load %arg8[%c0_73, %c0_74, %c0_75] : memref<8x8x128xf32, #tpu.memory_space<vmem>>, vector<8x8x128xf32>
    tpu.vector_store %arg8[%c0_73, %c0_74, %c0_75], %110 {strides = array<i32>} : memref<8x8x128xf32, #tpu.memory_space<vmem>>, vector<8x8x128xf32>,
    return
  }
  func.func @transform_0(%arg0: i32, %arg1: i32) -> (i32, i32, i32) {
    %c0_i32 = arith.constant 0 : i32
    %c0_i32_0 = arith.constant 0 : i32
    return %arg1, %arg0, %c0_i32 : i32, i32, i32
  }
  func.func @transform_1(%arg0: i32, %arg1: i32) -> (i32, i32) {
    %c0_i32 = arith.constant 0 : i32
    %c0_i32_0 = arith.constant 0 : i32
    %c0_i32_1 = arith.constant 0 : i32
    return %c0_i32, %c0_i32_0 : i32, i32
  }
  func.func @transform_2(%arg0: i32, %arg1: i32) -> (i32, i32) {
    %c0_i32 = arith.constant 0 : i32
    %c0_i32_0 = arith.constant 0 : i32
    %c0_i32_1 = arith.constant 0 : i32
    return %c0_i32, %c0_i32_0 : i32, i32
  }
  func.func @transform_3(%arg0: i32, %arg1: i32) -> (i32, i32) {
    %c0_i32 = arith.constant 0 : i32
    %c0_i32_0 = arith.constant 0 : i32
    %c0_i32_1 = arith.constant 0 : i32
    return %c0_i32, %c0_i32_0 : i32, i32
  }
  func.func @transform_4(%arg0: i32, %arg1: i32) -> (i32, i32) {
    %c0_i32 = arith.constant 0 : i32
    %c0_i32_0 = arith.constant 0 : i32
    %c0_i32_1 = arith.constant 0 : i32
    return %c0_i32, %c0_i32_0 : i32, i32
  }
  func.func @transform_5(%arg0: i32, %arg1: i32) -> (i32, i32) {
    %c0_i32 = arith.constant 0 : i32
    %c0_i32_0 = arith.constant 0 : i32
    %c0_i32_1 = arith.constant 0 : i32
    return %c0_i32, %c0_i32_0 : i32, i32
  }
  func.func @transform_6(%arg0: i32, %arg1: i32) -> (i32, i32, i32) {
    %c0_i32 = arith.constant 0 : i32
    %c0_i32_0 = arith.constant 0 : i32
    return %arg1, %arg0, %c0_i32 : i32, i32, i32
  }
  func.func @transform_7(%arg0: i32, %arg1: i32) -> (i32, i32, i32) {
    %c0_i32 = arith.constant 0 : i32
    %c0_i32_0 = arith.constant 0 : i32
    return %arg1, %arg0, %c0_i32 : i32, i32, i32
  }
}

</mosaic_0001>

<llo_original>
// kernel: tpu_custom_call.1
$region0: #{tpu_custom_call.1}
  #allocation0 [shape = 'u32[]', space=smem, size = 0x4, offset = 0x4, fixed_abs, tag = 'smem constant byte address 0x4 - core index']
  #allocation1 [shape = 'u32[144,128]{1,0:T(1,128)}', space=vmem, size = 0x12000, scoped, tag = 'internal scratch']
  #allocation2 [shape = 'f32[8,128]{1,0:T(8,128)}', space=vmem, size = 0x1000, scoped, tag = 'scratch operand']
  #allocation3 [shape = 'f32[8,8,128]{2,1,0:T(8,128)}', space=vmem, size = 0x8000, scoped, tag = 'scratch operand']
  %s0 = inlined_call_operand.hbm [shape: f32[8,8,128], index: 0, kind: input, shape index: {}]
  %s1 = inlined_call_operand.hbm [shape: f32[128,128], index: 1, kind: input, shape index: {}]
  %s2 = inlined_call_operand.vmem [shape: f32[1,128], index: 2, kind: input, shape index: {}]
  %s3 = inlined_call_operand.hbm [shape: f32[128,128], index: 3, kind: input, shape index: {}]
  %s4 = inlined_call_operand.hbm [shape: f32[128,128], index: 4, kind: input, shape index: {}]
  %s5 = inlined_call_operand.vmem [shape: f32[1,128], index: 5, kind: input, shape index: {}]
  %s6 = inlined_call_operand.hbm [shape: f32[8,8,128], index: 6, kind: output, shape index: {0}]
  %s7 = inlined_call_operand.hbm [shape: f32[8,8,128], index: 7, kind: output, shape index: {1}]
  %8 = xla_tuple %s6, %s7
  %s9 = sld [smem:[#allocation0]]
  $region62: #{tpu_custom_call.1} parent=0
    _
  %s11 = ssub.s32 1, %s9
  %s12 = scalar_select 0, %s11, %s9
  $region1: #{tpu_custom_call.1} parent=0
    #allocation4 [shape = 'u8[32768]{0}', space=vmem, size = 0x8000, scoped, tag = 'input window, operand 0, single buffered']
    #allocation5 [shape = 's32[1]{0}', space=sflag, size = 0x4, scoped, tag = 'scoped memory for tpu_custom_call.1']
    #allocation6 [shape = 's32[1]{0}', space=sflag, size = 0x4, scoped, tag = 'scoped memory for tpu_custom_call.1']
    #allocation7 [shape = 'u8[65536]{0}', space=vmem, size = 0x10000, scoped, tag = 'input window, operand 1, single buffered']
    #allocation8 [shape = 's32[1]{0}', space=sflag, size = 0x4, scoped, tag = 'scoped memory for tpu_custom_call.1']
    #allocation9 [shape = 'u8[65536]{0}', space=vmem, size = 0x10000, scoped, tag = 'input window, operand 3, single buffered']
    #allocation10 [shape = 'u8[65536]{0}', space=vmem, size = 0x10000, scoped, tag = 'input window, operand 4, single buffered']
    #allocation11 [shape = 's32[1]{0}', space=sflag, size = 0x4, scoped, tag = 'scoped memory for tpu_custom_call.1']
    #allocation12 [shape = 'u8[32768]{0}', space=vmem, size = 0x8000, scoped, tag = 'output window, operand 0, single buffered']
    #allocation13 [shape = 'u8[32768]{0}', space=vmem, size = 0x8000, scoped, tag = 'output window, operand 1, single buffered']
    #allocation14 [shape = 's32[1]{0}', space=sflag, size = 0x4, scoped, tag = 'scoped memory for tpu_custom_call.1']
    %13 = vsyncpa [#allocation5], 0
    %14 = vsyncpa [#allocation8], 0
    %15 = vsyncpa [#allocation11], 0
    %16 = vsyncpa [#allocation6], 0
    %17 = vsyncpa [#allocation14], 0
    // Predicated region
    $region2: #{tpu_custom_call.1} parent=1 // pred_check
      _
    $region3: #{tpu_custom_call.1} parent=1 // pred_check_branch
      %19 = sbr.rel (0) target = $region5
    $region4: #{tpu_custom_call.1} parent=1 // pred_region
      %s21 = ssub.s32 1024, 1024
      %22 = vsyncadd [#allocation5], %s21
      %s23 = sshll.u32 [#allocation4], 4
      %s24 = int_to_ptr.vmem [resolvable:$true] %s23
      %29 = dma.hbm_to_vmem [thread:$0]  %s0, 1024, %s24, [#allocation5], 128, 128, 8
    $region5: #{tpu_custom_call.1} parent=1 // pred_fallthru
      _
    // Predicated region
    $region6: #{tpu_custom_call.1} parent=1 // pred_check
      _
    $region7: #{tpu_custom_call.1} parent=1 // pred_check_branch
      %31 = sbr.rel (0) target = $region9
    $region8: #{tpu_custom_call.1} parent=1 // pred_region
      %s33 = ssub.s32 2048, 2048
      %34 = vsyncadd [#allocation8], %s33
      %s35 = sshll.u32 [#allocation7], 4
      %s36 = int_to_ptr.vmem [resolvable:$true] %s35
      %41 = dma.hbm_to_vmem [thread:$0]  %s1, 2048, %s36, [#allocation8], 128, 128, 8
    $region9: #{tpu_custom_call.1} parent=1 // pred_fallthru
      _
    // Predicated region
    $region10: #{tpu_custom_call.1} parent=1 // pred_check
      _
    $region11: #{tpu_custom_call.1} parent=1 // pred_check_branch
      %43 = sbr.rel (0) target = $region13
    $region12: #{tpu_custom_call.1} parent=1 // pred_region
      _
    $region13: #{tpu_custom_call.1} parent=1 // pred_fallthru
      _
    // Predicated region
    $region14: #{tpu_custom_call.1} parent=1 // pred_check
      _
    $region15: #{tpu_custom_call.1} parent=1 // pred_check_branch
      %45 = sbr.rel (0) target = $region17
    $region16: #{tpu_custom_call.1} parent=1 // pred_region
      %s47 = ssub.s32 2048, 2048
      %48 = vsyncadd [#allocation8], %s47
      %s49 = sshll.u32 [#allocation9], 4
      %s50 = int_to_ptr.vmem [resolvable:$true] %s49
      %55 = dma.hbm_to_vmem [thread:$0]  %s3, 2048, %s50, [#allocation8], 128, 128, 8
    $region17: #{tpu_custom_call.1} parent=1 // pred_fallthru
      _
    // Predicated region
    $region18: #{tpu_custom_call.1} parent=1 // pred_check
      _
    $region19: #{tpu_custom_call.1} parent=1 // pred_check_branch
      %57 = sbr.rel (0) target = $region21
    $region20: #{tpu_custom_call.1} parent=1 // pred_region
      %s59 = ssub.s32 2048, 2048
      %60 = vsyncadd [#allocation11], %s59
      %s61 = sshll.u32 [#allocation10], 4
      %s62 = int_to_ptr.vmem [resolvable:$true] %s61
      %67 = dma.hbm_to_vmem [thread:$0]  %s4, 2048, %s62, [#allocation11], 128, 128, 8
    $region21: #{tpu_custom_call.1} parent=1 // pred_fallthru
      _
    // Predicated region
    $region22: #{tpu_custom_call.1} parent=1 // pred_check
      _
    $region23: #{tpu_custom_call.1} parent=1 // pred_check_branch
      %69 = sbr.rel (0) target = $region25
    $region24: #{tpu_custom_call.1} parent=1 // pred_region
      _
    $region25: #{tpu_custom_call.1} parent=1 // pred_fallthru
      _
    // Predicated region
    $region26: #{tpu_custom_call.1} parent=1 // pred_check
      _
    $region27: #{tpu_custom_call.1} parent=1 // pred_check_branch
      %71 = sbr.rel (0) target = $region29
    $region28: #{tpu_custom_call.1} parent=1 // pred_region
      %72 = dma.done [#allocation5], 1024
    $region29: #{tpu_custom_call.1} parent=1 // pred_fallthru
      _
    // Predicated region
    $region30: #{tpu_custom_call.1} parent=1 // pred_check
      _
    $region31: #{tpu_custom_call.1} parent=1 // pred_check_branch
      %74 = sbr.rel (0) target = $region33
    $region32: #{tpu_custom_call.1} parent=1 // pred_region
      %75 = dma.done [#allocation8], 2048
    $region33: #{tpu_custom_call.1} parent=1 // pred_fallthru
      _
    // Predicated region
    $region34: #{tpu_custom_call.1} parent=1 // pred_check
      _
    $region35: #{tpu_custom_call.1} parent=1 // pred_check_branch
      %77 = sbr.rel (0) target = $region37
    $region36: #{tpu_custom_call.1} parent=1 // pred_region
      %78 = dma.done [#allocation8], 2048
    $region37: #{tpu_custom_call.1} parent=1 // pred_fallthru
      _
    // Predicated region
    $region38: #{tpu_custom_call.1} parent=1 // pred_check
      _
    $region39: #{tpu_custom_call.1} parent=1 // pred_check_branch
      %80 = sbr.rel (0) target = $region41
    $region40: #{tpu_custom_call.1} parent=1 // pred_region
      %81 = dma.done [#allocation11], 2048
    $region41: #{tpu_custom_call.1} parent=1 // pred_fallthru
      _
    %p82 = scmp.eq.s32.totalorder 0, 0
    // Predicated region
    $region42: #{tpu_custom_call.1} parent=1 // pred_check
      %p83 = pneg %p82
    $region43: #{tpu_custom_call.1} parent=1 // pred_check_branch
      %85 = sbr.rel (%p83) target = $region45
    $region44: #{tpu_custom_call.1} parent=1 // pred_region
      %86 = vst [vmem:[#allocation2] sm:$0xff] 0.0
    $region45: #{tpu_custom_call.1} parent=1 // pred_fallthru
      _
    %v87 = vld [vmem:[#allocation4] sm:$0xff]
    %v88 = vld [vmem:[#allocation4 + $0x8] sm:$0xff]
    %v89 = vld [vmem:[#allocation4 + $0x10] sm:$0xff]
    %v90 = vld [vmem:[#allocation4 + $0x18] sm:$0xff]
    %v91 = vld [vmem:[#allocation4 + $0x20] sm:$0xff]
    %v92 = vld [vmem:[#allocation4 + $0x28] sm:$0xff]
    %v93 = vld [vmem:[#allocation4 + $0x30] sm:$0xff]
    %v94 = vld [vmem:[#allocation4 + $0x38] sm:$0xff]
    %v95 = vld [vmem:[#allocation7] sm:$0xff]
    %v96 = vld [vmem:[#allocation7 + $0x8] sm:$0xff]
    %v97 = vld [vmem:[#allocation7 + $0x10] sm:$0xff]
    %v98 = vld [vmem:[#allocation7 + $0x18] sm:$0xff]
    %v99 = vld [vmem:[#allocation7 + $0x20] sm:$0xff]
    %v100 = vld [vmem:[#allocation7 + $0x28] sm:$0xff]
    %v101 = vld [vmem:[#allocation7 + $0x30] sm:$0xff]
    %v102 = vld [vmem:[#allocation7 + $0x38] sm:$0xff]
    %v103 = vld [vmem:[#allocation7 + $0x40] sm:$0xff]
    %v104 = vld [vmem:[#allocation7 + $0x48] sm:$0xff]
    %v105 = vld [vmem:[#allocation7 + $0x50] sm:$0xff]
    %v106 = vld [vmem:[#allocation7 + $0x58] sm:$0xff]
    %v107 = vld [vmem:[#allocation7 + $0x60] sm:$0xff]
    %v108 = vld [vmem:[#allocation7 + $0x68] sm:$0xff]
    %v109 = vld [vmem:[#allocation7 + $0x70] sm:$0xff]
    %v110 = vld [vmem:[#allocation7 + $0x78] sm:$0xff]
    %v111 = vld [vmem:[%s2] sm:$0x1]
    %v113 = vlaneseq
    %v114 = vshrl.u32 %v113, 7
    %v115 = vsub.s32 0, %v114
    %v116 = vrot.slane %v111, %v115
    %118 = vmatprep.subr.mxu0 0.0
    %119 = vmatpush1.msra.mxu0 %v110
    %120 = vmatprep.subr.mxu0 0.0
    %121 = vmatpush1.msra.mxu0 %v109
    %122 = vmatprep.subr.mxu0 0.0
    %123 = vmatpush1.msra.mxu0 %v108
    %124 = vmatprep.subr.mxu0 0.0
    %125 = vmatpush1.msra.mxu0 %v107
    %126 = vmatprep.subr.mxu0 0.0
    %127 = vmatpush1.msra.mxu0 %v106
    %128 = vmatprep.subr.mxu0 0.0
    %129 = vmatpush1.msra.mxu0 %v105
    %130 = vmatprep.subr.mxu0 0.0
    %131 = vmatpush1.msra.mxu0 %v104
    %132 = vmatprep.subr.mxu0 0.0
    %133 = vmatpush1.msra.mxu0 %v103
    %134 = vmatprep.subr.mxu0 0.0
    %135 = vmatpush1.msra.mxu0 %v102
    %136 = vmatprep.subr.mxu0 0.0
    %137 = vmatpush1.msra.mxu0 %v101
    %138 = vmatprep.subr.mxu0 0.0
    %139 = vmatpush1.msra.mxu0 %v100
    %140 = vmatprep.subr.mxu0 0.0
    %141 = vmatpush1.msra.mxu0 %v99
    %142 = vmatprep.subr.mxu0 0.0
    %143 = vmatpush1.msra.mxu0 %v98
    %144 = vmatprep.subr.mxu0 0.0
    %145 = vmatpush1.msra.mxu0 %v97
    %146 = vmatprep.subr.mxu0 0.0
    %147 = vmatpush1.msra.mxu0 %v96
    %148 = vmatprep.subr.mxu0 0.0
    %149 = vmatpush1.msra.mxu0 %v95
    %150 = vmatprep.subr.mxu0 0.0
    %151 = vmatpush2.msra.mxu0 0.0
    %152 = vmatprep.subr.mxu0 0.0
    %153 = vmatpush2.msra.mxu0 0.0
    %154 = vmatprep.subr.mxu0 0.0
    %155 = vmatpush2.msra.mxu0 0.0
    %156 = vmatprep.subr.mxu0 0.0
    %157 = vmatpush2.msra.mxu0 0.0
    %158 = vmatprep.subr.mxu0 0.0
    %159 = vmatpush2.msra.mxu0 0.0
    %160 = vmatprep.subr.mxu0 0.0
    %161 = vmatpush2.msra.mxu0 0.0
    %162 = vmatprep.subr.mxu0 0.0
    %163 = vmatpush2.msra.mxu0 0.0
    %164 = vmatprep.subr.mxu0 0.0
    %165 = vmatpush2.msra.mxu0 0.0
    %166 = vmatprep.subr.mxu0 0.0
    %167 = vmatpush2.msra.mxu0 0.0
    %168 = vmatprep.subr.mxu0 0.0
    %169 = vmatpush2.msra.mxu0 0.0
    %170 = vmatprep.subr.mxu0 0.0
    %171 = vmatpush2.msra.mxu0 0.0
    %172 = vmatprep.subr.mxu0 0.0
    %173 = vmatpush2.msra.mxu0 0.0
    %174 = vmatprep.subr.mxu0 0.0
    %175 = vmatpush2.msra.mxu0 0.0
    %176 = vmatprep.subr.mxu0 0.0
    %177 = vmatpush2.msra.mxu0 0.0
    %178 = vmatprep.subr.mxu0 0.0
    %179 = vmatpush2.msra.mxu0 0.0
    %180 = vmatprep.subr.mxu0 0.0
    %181 = vmatpush2.msra.mxu0 0.0
    %182 = vmatprep.mubr.f32.mxu0 0.0
    %183 = vmatmul.mubr.f32.gmra.mxu0 %v87
    %v184 = vpop.f32.mrf.mxu0
    %v185 = vadd.f32 %v116, %v184
    %v186 = vpop.f32.mrf.mxu0
    %187 = vmatprep.mubr.f32.mxu0 0.0
    %188 = vmatmul.mubr.f32.gmra.mxu0 %v88
    %v189 = vpop.f32.mrf.mxu0
    %v190 = vadd.f32 %v116, %v189
    %v191 = vpop.f32.mrf.mxu0
    %192 = vmatprep.mubr.f32.mxu0 0.0
    %193 = vmatmul.mubr.f32.gmra.mxu0 %v89
    %v194 = vpop.f32.mrf.mxu0
    %v195 = vadd.f32 %v116, %v194
    %v196 = vpop.f32.mrf.mxu0
    %197 = vmatprep.mubr.f32.mxu0 0.0
    %198 = vmatmul.mubr.f32.gmra.mxu0 %v90
    %v199 = vpop.f32.mrf.mxu0
    %v200 = vadd.f32 %v116, %v199
    %v201 = vpop.f32.mrf.mxu0
    %202 = vmatprep.mubr.f32.mxu0 0.0
    %203 = vmatmul.mubr.f32.gmra.mxu0 %v91
    %v204 = vpop.f32.mrf.mxu0
    %v205 = vadd.f32 %v116, %v204
    %v206 = vpop.f32.mrf.mxu0
    %207 = vmatprep.mubr.f32.mxu0 0.0
    %208 = vmatmul.mubr.f32.gmra.mxu0 %v92
    %v209 = vpop.f32.mrf.mxu0
    %v210 = vadd.f32 %v116, %v209
    %v211 = vpop.f32.mrf.mxu0
    %212 = vmatprep.mubr.f32.mxu0 0.0
    %213 = vmatmul.mubr.f32.gmra.mxu0 %v93
    %v214 = vpop.f32.mrf.mxu0
    %v215 = vadd.f32 %v116, %v214
    %v216 = vpop.f32.mrf.mxu0
    %217 = vmatprep.mubr.f32.mxu0 0.0
    %218 = vmatmul.mubr.f32.gmra.mxu0 %v94
    %v219 = vpop.f32.mrf.mxu0
    %v220 = vadd.f32 %v116, %v219
    %v221 = vpop.f32.mrf.mxu0
    %222 = vdwg.mxu0
    %223 = vst [vmem:[#allocation3] sm:$0xff] %v185
    %224 = vst [vmem:[#allocation3 + $0x8] sm:$0xff] %v190
    %225 = vst [vmem:[#allocation3 + $0x10] sm:$0xff] %v195
    %226 = vst [vmem:[#allocation3 + $0x18] sm:$0xff] %v200
    %227 = vst [vmem:[#allocation3 + $0x20] sm:$0xff] %v205
    %228 = vst [vmem:[#allocation3 + $0x28] sm:$0xff] %v210
    %229 = vst [vmem:[#allocation3 + $0x30] sm:$0xff] %v215
    %230 = vst [vmem:[#allocation3 + $0x38] sm:$0xff] %v220
    %v231 = vld [vmem:[#allocation9] sm:$0xff]
    %v232 = vld [vmem:[#allocation9 + $0x8] sm:$0xff]
    %v233 = vld [vmem:[#allocation9 + $0x10] sm:$0xff]
    %v234 = vld [vmem:[#allocation9 + $0x18] sm:$0xff]
    %v235 = vld [vmem:[#allocation9 + $0x20] sm:$0xff]
    %v236 = vld [vmem:[#allocation9 + $0x28] sm:$0xff]
    %v237 = vld [vmem:[#allocation9 + $0x30] sm:$0xff]
    %v238 = vld [vmem:[#allocation9 + $0x38] sm:$0xff]
    %v239 = vld [vmem:[#allocation9 + $0x40] sm:$0xff]
    %v240 = vld [vmem:[#allocation9 + $0x48] sm:$0xff]
    %v241 = vld [vmem:[#allocation9 + $0x50] sm:$0xff]
    %v242 = vld [vmem:[#allocation9 + $0x58] sm:$0xff]
    %v243 = vld [vmem:[#allocation9 + $0x60] sm:$0xff]
    %v244 = vld [vmem:[#allocation9 + $0x68] sm:$0xff]
    %v245 = vld [vmem:[#allocation9 + $0x70] sm:$0xff]
    %v246 = vld [vmem:[#allocation9 + $0x78] sm:$0xff]
    %v247 = vld [vmem:[#allocation2] sm:$0xff]
    %v248 = vld [vmem:[#allocation3] sm:$0xff]
    %249 = vmatprep.subr.mxu0 0.0
    %250 = vmatpush1.msra.mxu0 %v246
    %251 = vmatprep.subr.mxu0 0.0
    %252 = vmatpush1.msra.mxu0 %v245
    %253 = vmatprep.subr.mxu0 0.0
    %254 = vmatpush1.msra.mxu0 %v244
    %255 = vmatprep.subr.mxu0 0.0
    %256 = vmatpush1.msra.mxu0 %v243
    %257 = vmatprep.subr.mxu0 0.0
    %258 = vmatpush1.msra.mxu0 %v242
    %259 = vmatprep.subr.mxu0 0.0
    %260 = vmatpush1.msra.mxu0 %v241
    %261 = vmatprep.subr.mxu0 0.0
    %262 = vmatpush1.msra.mxu0 %v240
    %263 = vmatprep.subr.mxu0 0.0
    %264 = vmatpush1.msra.mxu0 %v239
    %265 = vmatprep.subr.mxu0 0.0
    %266 = vmatpush1.msra.mxu0 %v238
    %267 = vmatprep.subr.mxu0 0.0
    %268 = vmatpush1.msra.mxu0 %v237
    %269 = vmatprep.subr.mxu0 0.0
    %270 = vmatpush1.msra.mxu0 %v236
    %271 = vmatprep.subr.mxu0 0.0
    %272 = vmatpush1.msra.mxu0 %v235
    %273 = vmatprep.subr.mxu0 0.0
    %274 = vmatpush1.msra.mxu0 %v234
    %275 = vmatprep.subr.mxu0 0.0
    %276 = vmatpush1.msra.mxu0 %v233
    %277 = vmatprep.subr.mxu0 0.0
    %278 = vmatpush1.msra.mxu0 %v232
    %279 = vmatprep.subr.mxu0 0.0
    %280 = vmatpush1.msra.mxu0 %v231
    %281 = vmatprep.subr.mxu0 0.0
    %282 = vmatpush2.msra.mxu0 0.0
    %283 = vmatprep.subr.mxu0 0.0
    %284 = vmatpush2.msra.mxu0 0.0
    %285 = vmatprep.subr.mxu0 0.0
    %286 = vmatpush2.msra.mxu0 0.0
    %287 = vmatprep.subr.mxu0 0.0
    %288 = vmatpush2.msra.mxu0 0.0
    %289 = vmatprep.subr.mxu0 0.0
    %290 = vmatpush2.msra.mxu0 0.0
    %291 = vmatprep.subr.mxu0 0.0
    %292 = vmatpush2.msra.mxu0 0.0
    %293 = vmatprep.subr.mxu0 0.0
    %294 = vmatpush2.msra.mxu0 0.0
    %295 = vmatprep.subr.mxu0 0.0
    %296 = vmatpush2.msra.mxu0 0.0
    %297 = vmatprep.subr.mxu0 0.0
    %298 = vmatpush2.msra.mxu0 0.0
    %299 = vmatprep.subr.mxu0 0.0
    %300 = vmatpush2.msra.mxu0 0.0
    %301 = vmatprep.subr.mxu0 0.0
    %302 = vmatpush2.msra.mxu0 0.0
    %303 = vmatprep.subr.mxu0 0.0
    %304 = vmatpush2.msra.mxu0 0.0
    %305 = vmatprep.subr.mxu0 0.0
    %306 = vmatpush2.msra.mxu0 0.0
    %307 = vmatprep.subr.mxu0 0.0
    %308 = vmatpush2.msra.mxu0 0.0
    %309 = vmatprep.subr.mxu0 0.0
    %310 = vmatpush2.msra.mxu0 0.0
    %311 = vmatprep.subr.mxu0 0.0
    %312 = vmatpush2.msra.mxu0 0.0
    %313 = vmatprep.mubr.f32.mxu0 0.0
    %314 = vmatmul.mubr.f32.gmra.mxu0 %v247
    %v315 = vpop.f32.mrf.mxu0
    %v316 = vadd.f32 0.0, %v315
    %v317 = vpop.f32.mrf.mxu0
    %318 = vdwg.mxu0
    %v319 = vadd.f32 %v248, %v316
    %v320 = vmax.f32 %v319, 0.0
    %321 = vst [vmem:[#allocation13] sm:$0xff] %v320
    %s322 = scalar_lea.vmem [#allocation3], 8
    %v323 = vld [vmem:[%s322] sm:$0xff]
    %324 = vmatprep.subr.mxu0 0.0
    %325 = vmatpush1.msra.mxu0 %v246
    %326 = vmatprep.subr.mxu0 0.0
    %327 = vmatpush1.msra.mxu0 %v245
    %328 = vmatprep.subr.mxu0 0.0
    %329 = vmatpush1.msra.mxu0 %v244
    %330 = vmatprep.subr.mxu0 0.0
    %331 = vmatpush1.msra.mxu0 %v243
    %332 = vmatprep.subr.mxu0 0.0
    %333 = vmatpush1.msra.mxu0 %v242
    %334 = vmatprep.subr.mxu0 0.0
    %335 = vmatpush1.msra.mxu0 %v241
    %336 = vmatprep.subr.mxu0 0.0
    %337 = vmatpush1.msra.mxu0 %v240
    %338 = vmatprep.subr.mxu0 0.0
    %339 = vmatpush1.msra.mxu0 %v239
    %340 = vmatprep.subr.mxu0 0.0
    %341 = vmatpush1.msra.mxu0 %v238
    %342 = vmatprep.subr.mxu0 0.0
    %343 = vmatpush1.msra.mxu0 %v237
    %344 = vmatprep.subr.mxu0 0.0
    %345 = vmatpush1.msra.mxu0 %v236
    %346 = vmatprep.subr.mxu0 0.0
    %347 = vmatpush1.msra.mxu0 %v235
    %348 = vmatprep.subr.mxu0 0.0
    %349 = vmatpush1.msra.mxu0 %v234
    %350 = vmatprep.subr.mxu0 0.0
    %351 = vmatpush1.msra.mxu0 %v233
    %352 = vmatprep.subr.mxu0 0.0
    %353 = vmatpush1.msra.mxu0 %v232
    %354 = vmatprep.subr.mxu0 0.0
    %355 = vmatpush1.msra.mxu0 %v231
    %356 = vmatprep.subr.mxu0 0.0
    %357 = vmatpush2.msra.mxu0 0.0
    %358 = vmatprep.subr.mxu0 0.0
    %359 = vmatpush2.msra.mxu0 0.0
    %360 = vmatprep.subr.mxu0 0.0
    %361 = vmatpush2.msra.mxu0 0.0
    %362 = vmatprep.subr.mxu0 0.0
    %363 = vmatpush2.msra.mxu0 0.0
    %364 = vmatprep.subr.mxu0 0.0
    %365 = vmatpush2.msra.mxu0 0.0
    %366 = vmatprep.subr.mxu0 0.0
    %367 = vmatpush2.msra.mxu0 0.0
    %368 = vmatprep.subr.mxu0 0.0
    %369 = vmatpush2.msra.mxu0 0.0
    %370 = vmatprep.subr.mxu0 0.0
    %371 = vmatpush2.msra.mxu0 0.0
    %372 = vmatprep.subr.mxu0 0.0
    %373 = vmatpush2.msra.mxu0 0.0
    %374 = vmatprep.subr.mxu0 0.0
    %375 = vmatpush2.msra.mxu0 0.0
    %376 = vmatprep.subr.mxu0 0.0
    %377 = vmatpush2.msra.mxu0 0.0
    %378 = vmatprep.subr.mxu0 0.0
    %379 = vmatpush2.msra.mxu0 0.0
    %380 = vmatprep.subr.mxu0 0.0
    %381 = vmatpush2.msra.mxu0 0.0
    %382 = vmatprep.subr.mxu0 0.0
    %383 = vmatpush2.msra.mxu0 0.0
    %384 = vmatprep.subr.mxu0 0.0
    %385 = vmatpush2.msra.mxu0 0.0
    %386 = vmatprep.subr.mxu0 0.0
    %387 = vmatpush2.msra.mxu0 0.0
    %388 = vmatprep.mubr.f32.mxu0 0.0
    %389 = vmatmul.mubr.f32.gmra.mxu0 %v320
    %v390 = vpop.f32.mrf.mxu0
    %v391 = vadd.f32 0.0, %v390
    %v392 = vpop.f32.mrf.mxu0
    %393 = vdwg.mxu0
    %v394 = vadd.f32 %v323, %v391
    %v395 = vmax.f32 %v394, 0.0
    %s396 = scalar_lea.vmem [#allocation13], 8
    %397 = vst [vmem:[%s396] sm:$0xff] %v395
    %s398 = scalar_lea.vmem [#allocation3], 16
    %v399 = vld [vmem:[%s398] sm:$0xff]
    %400 = vmatprep.subr.mxu0 0.0
    %401 = vmatpush1.msra.mxu0 %v246
    %402 = vmatprep.subr.mxu0 0.0
    %403 = vmatpush1.msra.mxu0 %v245
    %404 = vmatprep.subr.mxu0 0.0
    %405 = vmatpush1.msra.mxu0 %v244
    %406 = vmatprep.subr.mxu0 0.0
    %407 = vmatpush1.msra.mxu0 %v243
    %408 = vmatprep.subr.mxu0 0.0
    %409 = vmatpush1.msra.mxu0 %v242
    %410 = vmatprep.subr.mxu0 0.0
    %411 = vmatpush1.msra.mxu0 %v241
    %412 = vmatprep.subr.mxu0 0.0
    %413 = vmatpush1.msra.mxu0 %v240
    %414 = vmatprep.subr.mxu0 0.0
    %415 = vmatpush1.msra.mxu0 %v239
    %416 = vmatprep.subr.mxu0 0.0
    %417 = vmatpush1.msra.mxu0 %v238
    %418 = vmatprep.subr.mxu0 0.0
    %419 = vmatpush1.msra.mxu0 %v237
    %420 = vmatprep.subr.mxu0 0.0
    %421 = vmatpush1.msra.mxu0 %v236
    %422 = vmatprep.subr.mxu0 0.0
    %423 = vmatpush1.msra.mxu0 %v235
    %424 = vmatprep.subr.mxu0 0.0
    %425 = vmatpush1.msra.mxu0 %v234
    %426 = vmatprep.subr.mxu0 0.0
    %427 = vmatpush1.msra.mxu0 %v233
    %428 = vmatprep.subr.mxu0 0.0
    %429 = vmatpush1.msra.mxu0 %v232
    %430 = vmatprep.subr.mxu0 0.0
    %431 = vmatpush1.msra.mxu0 %v231
    %432 = vmatprep.subr.mxu0 0.0
    %433 = vmatpush2.msra.mxu0 0.0
    %434 = vmatprep.subr.mxu0 0.0
    %435 = vmatpush2.msra.mxu0 0.0
    %436 = vmatprep.subr.mxu0 0.0
    %437 = vmatpush2.msra.mxu0 0.0
    %438 = vmatprep.subr.mxu0 0.0
    %439 = vmatpush2.msra.mxu0 0.0
    %440 = vmatprep.subr.mxu0 0.0
    %441 = vmatpush2.msra.mxu0 0.0
    %442 = vmatprep.subr.mxu0 0.0
    %443 = vmatpush2.msra.mxu0 0.0
    %444 = vmatprep.subr.mxu0 0.0
    %445 = vmatpush2.msra.mxu0 0.0
    %446 = vmatprep.subr.mxu0 0.0
    %447 = vmatpush2.msra.mxu0 0.0
    %448 = vmatprep.subr.mxu0 0.0
    %449 = vmatpush2.msra.mxu0 0.0
    %450 = vmatprep.subr.mxu0 0.0
    %451 = vmatpush2.msra.mxu0 0.0
    %452 = vmatprep.subr.mxu0 0.0
    %453 = vmatpush2.msra.mxu0 0.0
    %454 = vmatprep.subr.mxu0 0.0
    %455 = vmatpush2.msra.mxu0 0.0
    %456 = vmatprep.subr.mxu0 0.0
    %457 = vmatpush2.msra.mxu0 0.0
    %458 = vmatprep.subr.mxu0 0.0
    %459 = vmatpush2.msra.mxu0 0.0
    %460 = vmatprep.subr.mxu0 0.0
    %461 = vmatpush2.msra.mxu0 0.0
    %462 = vmatprep.subr.mxu0 0.0
    %463 = vmatpush2.msra.mxu0 0.0
    %464 = vmatprep.mubr.f32.mxu0 0.0
    %465 = vmatmul.mubr.f32.gmra.mxu0 %v395
    %v466 = vpop.f32.mrf.mxu0
    %v467 = vadd.f32 0.0, %v466
    %v468 = vpop.f32.mrf.mxu0
    %469 = vdwg.mxu0
    %v470 = vadd.f32 %v399, %v467
    %v471 = vmax.f32 %v470, 0.0
    %s472 = scalar_lea.vmem [#allocation13], 16
    %473 = vst [vmem:[%s472] sm:$0xff] %v471
    %s474 = scalar_lea.vmem [#allocation3], 24
    %v475 = vld [vmem:[%s474] sm:$0xff]
    %476 = vmatprep.subr.mxu0 0.0
    %477 = vmatpush1.msra.mxu0 %v246
    %478 = vmatprep.subr.mxu0 0.0
    %479 = vmatpush1.msra.mxu0 %v245
    %480 = vmatprep.subr.mxu0 0.0
    %481 = vmatpush1.msra.mxu0 %v244
    %482 = vmatprep.subr.mxu0 0.0
    %483 = vmatpush1.msra.mxu0 %v243
    %484 = vmatprep.subr.mxu0 0.0
    %485 = vmatpush1.msra.mxu0 %v242
    %486 = vmatprep.subr.mxu0 0.0
    %487 = vmatpush1.msra.mxu0 %v241
    %488 = vmatprep.subr.mxu0 0.0
    %489 = vmatpush1.msra.mxu0 %v240
    %490 = vmatprep.subr.mxu0 0.0
    %491 = vmatpush1.msra.mxu0 %v239
    %492 = vmatprep.subr.mxu0 0.0
    %493 = vmatpush1.msra.mxu0 %v238
    %494 = vmatprep.subr.mxu0 0.0
    %495 = vmatpush1.msra.mxu0 %v237
    %496 = vmatprep.subr.mxu0 0.0
    %497 = vmatpush1.msra.mxu0 %v236
    %498 = vmatprep.subr.mxu0 0.0
    %499 = vmatpush1.msra.mxu0 %v235
    %500 = vmatprep.subr.mxu0 0.0
    %501 = vmatpush1.msra.mxu0 %v234
    %502 = vmatprep.subr.mxu0 0.0
    %503 = vmatpush1.msra.mxu0 %v233
    %504 = vmatprep.subr.mxu0 0.0
    %505 = vmatpush1.msra.mxu0 %v232
    %506 = vmatprep.subr.mxu0 0.0
    %507 = vmatpush1.msra.mxu0 %v231
    %508 = vmatprep.subr.mxu0 0.0
    %509 = vmatpush2.msra.mxu0 0.0
    %510 = vmatprep.subr.mxu0 0.0
    %511 = vmatpush2.msra.mxu0 0.0
    %512 = vmatprep.subr.mxu0 0.0
    %513 = vmatpush2.msra.mxu0 0.0
    %514 = vmatprep.subr.mxu0 0.0
    %515 = vmatpush2.msra.mxu0 0.0
    %516 = vmatprep.subr.mxu0 0.0
    %517 = vmatpush2.msra.mxu0 0.0
    %518 = vmatprep.subr.mxu0 0.0
    %519 = vmatpush2.msra.mxu0 0.0
    %520 = vmatprep.subr.mxu0 0.0
    %521 = vmatpush2.msra.mxu0 0.0
    %522 = vmatprep.subr.mxu0 0.0
    %523 = vmatpush2.msra.mxu0 0.0
    %524 = vmatprep.subr.mxu0 0.0
    %525 = vmatpush2.msra.mxu0 0.0
    %526 = vmatprep.subr.mxu0 0.0
    %527 = vmatpush2.msra.mxu0 0.0
    %528 = vmatprep.subr.mxu0 0.0
    %529 = vmatpush2.msra.mxu0 0.0
    %530 = vmatprep.subr.mxu0 0.0
    %531 = vmatpush2.msra.mxu0 0.0
    %532 = vmatprep.subr.mxu0 0.0
    %533 = vmatpush2.msra.mxu0 0.0
    %534 = vmatprep.subr.mxu0 0.0
    %535 = vmatpush2.msra.mxu0 0.0
    %536 = vmatprep.subr.mxu0 0.0
    %537 = vmatpush2.msra.mxu0 0.0
    %538 = vmatprep.subr.mxu0 0.0
    %539 = vmatpush2.msra.mxu0 0.0
    %540 = vmatprep.mubr.f32.mxu0 0.0
    %541 = vmatmul.mubr.f32.gmra.mxu0 %v471
    %v542 = vpop.f32.mrf.mxu0
    %v543 = vadd.f32 0.0, %v542
    %v544 = vpop.f32.mrf.mxu0
    %545 = vdwg.mxu0
    %v546 = vadd.f32 %v475, %v543
    %v547 = vmax.f32 %v546, 0.0
    %s548 = scalar_lea.vmem [#allocation13], 24
    %549 = vst [vmem:[%s548] sm:$0xff] %v547
    %s550 = scalar_lea.vmem [#allocation3], 32
    %v551 = vld [vmem:[%s550] sm:$0xff]
    %552 = vmatprep.subr.mxu0 0.0
    %553 = vmatpush1.msra.mxu0 %v246
    %554 = vmatprep.subr.mxu0 0.0
    %555 = vmatpush1.msra.mxu0 %v245
    %556 = vmatprep.subr.mxu0 0.0
    %557 = vmatpush1.msra.mxu0 %v244
    %558 = vmatprep.subr.mxu0 0.0
    %559 = vmatpush1.msra.mxu0 %v243
    %560 = vmatprep.subr.mxu0 0.0
    %561 = vmatpush1.msra.mxu0 %v242
    %562 = vmatprep.subr.mxu0 0.0
    %563 = vmatpush1.msra.mxu0 %v241
    %564 = vmatprep.subr.mxu0 0.0
    %565 = vmatpush1.msra.mxu0 %v240
    %566 = vmatprep.subr.mxu0 0.0
    %567 = vmatpush1.msra.mxu0 %v239
    %568 = vmatprep.subr.mxu0 0.0
    %569 = vmatpush1.msra.mxu0 %v238
    %570 = vmatprep.subr.mxu0 0.0
    %571 = vmatpush1.msra.mxu0 %v237
    %572 = vmatprep.subr.mxu0 0.0
    %573 = vmatpush1.msra.mxu0 %v236
    %574 = vmatprep.subr.mxu0 0.0
    %575 = vmatpush1.msra.mxu0 %v235
    %576 = vmatprep.subr.mxu0 0.0
    %577 = vmatpush1.msra.mxu0 %v234
    %578 = vmatprep.subr.mxu0 0.0
    %579 = vmatpush1.msra.mxu0 %v233
    %580 = vmatprep.subr.mxu0 0.0
    %581 = vmatpush1.msra.mxu0 %v232
    %582 = vmatprep.subr.mxu0 0.0
    %583 = vmatpush1.msra.mxu0 %v231
    %584 = vmatprep.subr.mxu0 0.0
    %585 = vmatpush2.msra.mxu0 0.0
    %586 = vmatprep.subr.mxu0 0.0
    %587 = vmatpush2.msra.mxu0 0.0
    %588 = vmatprep.subr.mxu0 0.0
    %589 = vmatpush2.msra.mxu0 0.0
    %590 = vmatprep.subr.mxu0 0.0
    %591 = vmatpush2.msra.mxu0 0.0
    %592 = vmatprep.subr.mxu0 0.0
    %593 = vmatpush2.msra.mxu0 0.0
    %594 = vmatprep.subr.mxu0 0.0
    %595 = vmatpush2.msra.mxu0 0.0
    %596 = vmatprep.subr.mxu0 0.0
    %597 = vmatpush2.msra.mxu0 0.0
    %598 = vmatprep.subr.mxu0 0.0
    %599 = vmatpush2.msra.mxu0 0.0
    %600 = vmatprep.subr.mxu0 0.0
    %601 = vmatpush2.msra.mxu0 0.0
    %602 = vmatprep.subr.mxu0 0.0
    %603 = vmatpush2.msra.mxu0 0.0
    %604 = vmatprep.subr.mxu0 0.0
    %605 = vmatpush2.msra.mxu0 0.0
    %606 = vmatprep.subr.mxu0 0.0
    %607 = vmatpush2.msra.mxu0 0.0
    %608 = vmatprep.subr.mxu0 0.0
    %609 = vmatpush2.msra.mxu0 0.0
    %610 = vmatprep.subr.mxu0 0.0
    %611 = vmatpush2.msra.mxu0 0.0
    %612 = vmatprep.subr.mxu0 0.0
    %613 = vmatpush2.msra.mxu0 0.0
    %614 = vmatprep.subr.mxu0 0.0
    %615 = vmatpush2.msra.mxu0 0.0
    %616 = vmatprep.mubr.f32.mxu0 0.0
    %617 = vmatmul.mubr.f32.gmra.mxu0 %v547
    %v618 = vpop.f32.mrf.mxu0
    %v619 = vadd.f32 0.0, %v618
    %v620 = vpop.f32.mrf.mxu0
    %621 = vdwg.mxu0
    %v622 = vadd.f32 %v551, %v619
    %v623 = vmax.f32 %v622, 0.0
    %s624 = scalar_lea.vmem [#allocation13], 32
    %625 = vst [vmem:[%s624] sm:$0xff] %v623
    %s626 = scalar_lea.vmem [#allocation3], 40
    %v627 = vld [vmem:[%s626] sm:$0xff]
    %628 = vmatprep.subr.mxu0 0.0
    %629 = vmatpush1.msra.mxu0 %v246
    %630 = vmatprep.subr.mxu0 0.0
    %631 = vmatpush1.msra.mxu0 %v245
    %632 = vmatprep.subr.mxu0 0.0
    %633 = vmatpush1.msra.mxu0 %v244
    %634 = vmatprep.subr.mxu0 0.0
    %635 = vmatpush1.msra.mxu0 %v243
    %636 = vmatprep.subr.mxu0 0.0
    %637 = vmatpush1.msra.mxu0 %v242
    %638 = vmatprep.subr.mxu0 0.0
    %639 = vmatpush1.msra.mxu0 %v241
    %640 = vmatprep.subr.mxu0 0.0
    %641 = vmatpush1.msra.mxu0 %v240
    %642 = vmatprep.subr.mxu0 0.0
    %643 = vmatpush1.msra.mxu0 %v239
    %644 = vmatprep.subr.mxu0 0.0
    %645 = vmatpush1.msra.mxu0 %v238
    %646 = vmatprep.subr.mxu0 0.0
    %647 = vmatpush1.msra.mxu0 %v237
    %648 = vmatprep.subr.mxu0 0.0
    %649 = vmatpush1.msra.mxu0 %v236
    %650 = vmatprep.subr.mxu0 0.0
    %651 = vmatpush1.msra.mxu0 %v235
    %652 = vmatprep.subr.mxu0 0.0
    %653 = vmatpush1.msra.mxu0 %v234
    %654 = vmatprep.subr.mxu0 0.0
    %655 = vmatpush1.msra.mxu0 %v233
    %656 = vmatprep.subr.mxu0 0.0
    %657 = vmatpush1.msra.mxu0 %v232
    %658 = vmatprep.subr.mxu0 0.0
    %659 = vmatpush1.msra.mxu0 %v231
    %660 = vmatprep.subr.mxu0 0.0
    %661 = vmatpush2.msra.mxu0 0.0
    %662 = vmatprep.subr.mxu0 0.0
    %663 = vmatpush2.msra.mxu0 0.0
    %664 = vmatprep.subr.mxu0 0.0
    %665 = vmatpush2.msra.mxu0 0.0
    %666 = vmatprep.subr.mxu0 0.0
    %667 = vmatpush2.msra.mxu0 0.0
    %668 = vmatprep.subr.mxu0 0.0
    %669 = vmatpush2.msra.mxu0 0.0
    %670 = vmatprep.subr.mxu0 0.0
    %671 = vmatpush2.msra.mxu0 0.0
    %672 = vmatprep.subr.mxu0 0.0
    %673 = vmatpush2.msra.mxu0 0.0
    %674 = vmatprep.subr.mxu0 0.0
    %675 = vmatpush2.msra.mxu0 0.0
    %676 = vmatprep.subr.mxu0 0.0
    %677 = vmatpush2.msra.mxu0 0.0
    %678 = vmatprep.subr.mxu0 0.0
    %679 = vmatpush2.msra.mxu0 0.0
    %680 = vmatprep.subr.mxu0 0.0
    %681 = vmatpush2.msra.mxu0 0.0
    %682 = vmatprep.subr.mxu0 0.0
    %683 = vmatpush2.msra.mxu0 0.0
    %684 = vmatprep.subr.mxu0 0.0
    %685 = vmatpush2.msra.mxu0 0.0
    %686 = vmatprep.subr.mxu0 0.0
    %687 = vmatpush2.msra.mxu0 0.0
    %688 = vmatprep.subr.mxu0 0.0
    %689 = vmatpush2.msra.mxu0 0.0
    %690 = vmatprep.subr.mxu0 0.0
    %691 = vmatpush2.msra.mxu0 0.0
    %692 = vmatprep.mubr.f32.mxu0 0.0
    %693 = vmatmul.mubr.f32.gmra.mxu0 %v623
    %v694 = vpop.f32.mrf.mxu0
    %v695 = vadd.f32 0.0, %v694
    %v696 = vpop.f32.mrf.mxu0
    %697 = vdwg.mxu0
    %v698 = vadd.f32 %v627, %v695
    %v699 = vmax.f32 %v698, 0.0
    %s700 = scalar_lea.vmem [#allocation13], 40
    %701 = vst [vmem:[%s700] sm:$0xff] %v699
    %s702 = scalar_lea.vmem [#allocation3], 48
    %v703 = vld [vmem:[%s702] sm:$0xff]
    %704 = vmatprep.subr.mxu0 0.0
    %705 = vmatpush1.msra.mxu0 %v246
    %706 = vmatprep.subr.mxu0 0.0
    %707 = vmatpush1.msra.mxu0 %v245
    %708 = vmatprep.subr.mxu0 0.0
    %709 = vmatpush1.msra.mxu0 %v244
    %710 = vmatprep.subr.mxu0 0.0
    %711 = vmatpush1.msra.mxu0 %v243
    %712 = vmatprep.subr.mxu0 0.0
    %713 = vmatpush1.msra.mxu0 %v242
    %714 = vmatprep.subr.mxu0 0.0
    %715 = vmatpush1.msra.mxu0 %v241
    %716 = vmatprep.subr.mxu0 0.0
    %717 = vmatpush1.msra.mxu0 %v240
    %718 = vmatprep.subr.mxu0 0.0
    %719 = vmatpush1.msra.mxu0 %v239
    %720 = vmatprep.subr.mxu0 0.0
    %721 = vmatpush1.msra.mxu0 %v238
    %722 = vmatprep.subr.mxu0 0.0
    %723 = vmatpush1.msra.mxu0 %v237
    %724 = vmatprep.subr.mxu0 0.0
    %725 = vmatpush1.msra.mxu0 %v236
    %726 = vmatprep.subr.mxu0 0.0
    %727 = vmatpush1.msra.mxu0 %v235
    %728 = vmatprep.subr.mxu0 0.0
    %729 = vmatpush1.msra.mxu0 %v234
    %730 = vmatprep.subr.mxu0 0.0
    %731 = vmatpush1.msra.mxu0 %v233
    %732 = vmatprep.subr.mxu0 0.0
    %733 = vmatpush1.msra.mxu0 %v232
    %734 = vmatprep.subr.mxu0 0.0
    %735 = vmatpush1.msra.mxu0 %v231
    %736 = vmatprep.subr.mxu0 0.0
    %737 = vmatpush2.msra.mxu0 0.0
    %738 = vmatprep.subr.mxu0 0.0
    %739 = vmatpush2.msra.mxu0 0.0
    %740 = vmatprep.subr.mxu0 0.0
    %741 = vmatpush2.msra.mxu0 0.0
    %742 = vmatprep.subr.mxu0 0.0
    %743 = vmatpush2.msra.mxu0 0.0
    %744 = vmatprep.subr.mxu0 0.0
    %745 = vmatpush2.msra.mxu0 0.0
    %746 = vmatprep.subr.mxu0 0.0
    %747 = vmatpush2.msra.mxu0 0.0
    %748 = vmatprep.subr.mxu0 0.0
    %749 = vmatpush2.msra.mxu0 0.0
    %750 = vmatprep.subr.mxu0 0.0
    %751 = vmatpush2.msra.mxu0 0.0
    %752 = vmatprep.subr.mxu0 0.0
    %753 = vmatpush2.msra.mxu0 0.0
    %754 = vmatprep.subr.mxu0 0.0
    %755 = vmatpush2.msra.mxu0 0.0
    %756 = vmatprep.subr.mxu0 0.0
    %757 = vmatpush2.msra.mxu0 0.0
    %758 = vmatprep.subr.mxu0 0.0
    %759 = vmatpush2.msra.mxu0 0.0
    %760 = vmatprep.subr.mxu0 0.0
    %761 = vmatpush2.msra.mxu0 0.0
    %762 = vmatprep.subr.mxu0 0.0
    %763 = vmatpush2.msra.mxu0 0.0
    %764 = vmatprep.subr.mxu0 0.0
    %765 = vmatpush2.msra.mxu0 0.0
    %766 = vmatprep.subr.mxu0 0.0
    %767 = vmatpush2.msra.mxu0 0.0
    %768 = vmatprep.mubr.f32.mxu0 0.0
    %769 = vmatmul.mubr.f32.gmra.mxu0 %v699
    %v770 = vpop.f32.mrf.mxu0
    %v771 = vadd.f32 0.0, %v770
    %v772 = vpop.f32.mrf.mxu0
    %773 = vdwg.mxu0
    %v774 = vadd.f32 %v703, %v771
    %v775 = vmax.f32 %v774, 0.0
    %s776 = scalar_lea.vmem [#allocation13], 48
    %777 = vst [vmem:[%s776] sm:$0xff] %v775
    %s778 = scalar_lea.vmem [#allocation3], 56
    %v779 = vld [vmem:[%s778] sm:$0xff]
    %780 = vmatprep.subr.mxu0 0.0
    %781 = vmatpush1.msra.mxu0 %v246
    %782 = vmatprep.subr.mxu0 0.0
    %783 = vmatpush1.msra.mxu0 %v245
    %784 = vmatprep.subr.mxu0 0.0
    %785 = vmatpush1.msra.mxu0 %v244
    %786 = vmatprep.subr.mxu0 0.0
    %787 = vmatpush1.msra.mxu0 %v243
    %788 = vmatprep.subr.mxu0 0.0
    %789 = vmatpush1.msra.mxu0 %v242
    %790 = vmatprep.subr.mxu0 0.0
    %791 = vmatpush1.msra.mxu0 %v241
    %792 = vmatprep.subr.mxu0 0.0
    %793 = vmatpush1.msra.mxu0 %v240
    %794 = vmatprep.subr.mxu0 0.0
    %795 = vmatpush1.msra.mxu0 %v239
    %796 = vmatprep.subr.mxu0 0.0
    %797 = vmatpush1.msra.mxu0 %v238
    %798 = vmatprep.subr.mxu0 0.0
    %799 = vmatpush1.msra.mxu0 %v237
    %800 = vmatprep.subr.mxu0 0.0
    %801 = vmatpush1.msra.mxu0 %v236
    %802 = vmatprep.subr.mxu0 0.0
    %803 = vmatpush1.msra.mxu0 %v235
    %804 = vmatprep.subr.mxu0 0.0
    %805 = vmatpush1.msra.mxu0 %v234
    %806 = vmatprep.subr.mxu0 0.0
    %807 = vmatpush1.msra.mxu0 %v233
    %808 = vmatprep.subr.mxu0 0.0
    %809 = vmatpush1.msra.mxu0 %v232
    %810 = vmatprep.subr.mxu0 0.0
    %811 = vmatpush1.msra.mxu0 %v231
    %812 = vmatprep.subr.mxu0 0.0
    %813 = vmatpush2.msra.mxu0 0.0
    %814 = vmatprep.subr.mxu0 0.0
    %815 = vmatpush2.msra.mxu0 0.0
    %816 = vmatprep.subr.mxu0 0.0
    %817 = vmatpush2.msra.mxu0 0.0
    %818 = vmatprep.subr.mxu0 0.0
    %819 = vmatpush2.msra.mxu0 0.0
    %820 = vmatprep.subr.mxu0 0.0
    %821 = vmatpush2.msra.mxu0 0.0
    %822 = vmatprep.subr.mxu0 0.0
    %823 = vmatpush2.msra.mxu0 0.0
    %824 = vmatprep.subr.mxu0 0.0
    %825 = vmatpush2.msra.mxu0 0.0
    %826 = vmatprep.subr.mxu0 0.0
    %827 = vmatpush2.msra.mxu0 0.0
    %828 = vmatprep.subr.mxu0 0.0
    %829 = vmatpush2.msra.mxu0 0.0
    %830 = vmatprep.subr.mxu0 0.0
    %831 = vmatpush2.msra.mxu0 0.0
    %832 = vmatprep.subr.mxu0 0.0
    %833 = vmatpush2.msra.mxu0 0.0
    %834 = vmatprep.subr.mxu0 0.0
    %835 = vmatpush2.msra.mxu0 0.0
    %836 = vmatprep.subr.mxu0 0.0
    %837 = vmatpush2.msra.mxu0 0.0
    %838 = vmatprep.subr.mxu0 0.0
    %839 = vmatpush2.msra.mxu0 0.0
    %840 = vmatprep.subr.mxu0 0.0
    %841 = vmatpush2.msra.mxu0 0.0
    %842 = vmatprep.subr.mxu0 0.0
    %843 = vmatpush2.msra.mxu0 0.0
    %844 = vmatprep.mubr.f32.mxu0 0.0
    %845 = vmatmul.mubr.f32.gmra.mxu0 %v775
    %v846 = vpop.f32.mrf.mxu0
    %v847 = vadd.f32 0.0, %v846
    %v848 = vpop.f32.mrf.mxu0
    %849 = vdwg.mxu0
    %v850 = vadd.f32 %v779, %v847
    %v851 = vmax.f32 %v850, 0.0
    %s852 = scalar_lea.vmem [#allocation13], 56
    %853 = vst [vmem:[%s852] sm:$0xff] %v851
    %854 = vst [vmem:[#allocation2] sm:$0xff] %v851
    %v855 = vld [vmem:[#allocation13] sm:$0xff]
    %v856 = vld [vmem:[#allocation13 + $0x8] sm:$0xff]
    %v857 = vld [vmem:[#allocation13 + $0x10] sm:$0xff]
    %v858 = vld [vmem:[#allocation13 + $0x18] sm:$0xff]
    %v859 = vld [vmem:[#allocation13 + $0x20] sm:$0xff]
    %v860 = vld [vmem:[#allocation13 + $0x28] sm:$0xff]
    %v861 = vld [vmem:[#allocation13 + $0x30] sm:$0xff]
    %v862 = vld [vmem:[#allocation13 + $0x38] sm:$0xff]
    %v863 = vld [vmem:[#allocation10] sm:$0xff]
    %v864 = vld [vmem:[#allocation10 + $0x8] sm:$0xff]
    %v865 = vld [vmem:[#allocation10 + $0x10] sm:$0xff]
    %v866 = vld [vmem:[#allocation10 + $0x18] sm:$0xff]
    %v867 = vld [vmem:[#allocation10 + $0x20] sm:$0xff]
    %v868 = vld [vmem:[#allocation10 + $0x28] sm:$0xff]
    %v869 = vld [vmem:[#allocation10 + $0x30] sm:$0xff]
    %v870 = vld [vmem:[#allocation10 + $0x38] sm:$0xff]
    %v871 = vld [vmem:[#allocation10 + $0x40] sm:$0xff]
    %v872 = vld [vmem:[#allocation10 + $0x48] sm:$0xff]
    %v873 = vld [vmem:[#allocation10 + $0x50] sm:$0xff]
    %v874 = vld [vmem:[#allocation10 + $0x58] sm:$0xff]
    %v875 = vld [vmem:[#allocation10 + $0x60] sm:$0xff]
    %v876 = vld [vmem:[#allocation10 + $0x68] sm:$0xff]
    %v877 = vld [vmem:[#allocation10 + $0x70] sm:$0xff]
    %v878 = vld [vmem:[#allocation10 + $0x78] sm:$0xff]
    %v879 = vld [vmem:[%s5] sm:$0x1]
    %v881 = vlaneseq
    %v882 = vshrl.u32 %v881, 7
    %v883 = vsub.s32 0, %v882
    %v884 = vrot.slane %v879, %v883
    %886 = vmatprep.subr.mxu0 0.0
    %887 = vmatpush1.msra.mxu0 %v878
    %888 = vmatprep.subr.mxu0 0.0
    %889 = vmatpush1.msra.mxu0 %v877
    %890 = vmatprep.subr.mxu0 0.0
    %891 = vmatpush1.msra.mxu0 %v876
    %892 = vmatprep.subr.mxu0 0.0
    %893 = vmatpush1.msra.mxu0 %v875
    %894 = vmatprep.subr.mxu0 0.0
    %895 = vmatpush1.msra.mxu0 %v874
    %896 = vmatprep.subr.mxu0 0.0
    %897 = vmatpush1.msra.mxu0 %v873
    %898 = vmatprep.subr.mxu0 0.0
    %899 = vmatpush1.msra.mxu0 %v872
    %900 = vmatprep.subr.mxu0 0.0
    %901 = vmatpush1.msra.mxu0 %v871
    %902 = vmatprep.subr.mxu0 0.0
    %903 = vmatpush1.msra.mxu0 %v870
    %904 = vmatprep.subr.mxu0 0.0
    %905 = vmatpush1.msra.mxu0 %v869
    %906 = vmatprep.subr.mxu0 0.0
    %907 = vmatpush1.msra.mxu0 %v868
    %908 = vmatprep.subr.mxu0 0.0
    %909 = vmatpush1.msra.mxu0 %v867
    %910 = vmatprep.subr.mxu0 0.0
    %911 = vmatpush1.msra.mxu0 %v866
    %912 = vmatprep.subr.mxu0 0.0
    %913 = vmatpush1.msra.mxu0 %v865
    %914 = vmatprep.subr.mxu0 0.0
    %915 = vmatpush1.msra.mxu0 %v864
    %916 = vmatprep.subr.mxu0 0.0
    %917 = vmatpush1.msra.mxu0 %v863
    %918 = vmatprep.subr.mxu0 0.0
    %919 = vmatpush2.msra.mxu0 0.0
    %920 = vmatprep.subr.mxu0 0.0
    %921 = vmatpush2.msra.mxu0 0.0
    %922 = vmatprep.subr.mxu0 0.0
    %923 = vmatpush2.msra.mxu0 0.0
    %924 = vmatprep.subr.mxu0 0.0
    %925 = vmatpush2.msra.mxu0 0.0
    %926 = vmatprep.subr.mxu0 0.0
    %927 = vmatpush2.msra.mxu0 0.0
    %928 = vmatprep.subr.mxu0 0.0
    %929 = vmatpush2.msra.mxu0 0.0
    %930 = vmatprep.subr.mxu0 0.0
    %931 = vmatpush2.msra.mxu0 0.0
    %932 = vmatprep.subr.mxu0 0.0
    %933 = vmatpush2.msra.mxu0 0.0
    %934 = vmatprep.subr.mxu0 0.0
    %935 = vmatpush2.msra.mxu0 0.0
    %936 = vmatprep.subr.mxu0 0.0
    %937 = vmatpush2.msra.mxu0 0.0
    %938 = vmatprep.subr.mxu0 0.0
    %939 = vmatpush2.msra.mxu0 0.0
    %940 = vmatprep.subr.mxu0 0.0
    %941 = vmatpush2.msra.mxu0 0.0
    %942 = vmatprep.subr.mxu0 0.0
    %943 = vmatpush2.msra.mxu0 0.0
    %944 = vmatprep.subr.mxu0 0.0
    %945 = vmatpush2.msra.mxu0 0.0
    %946 = vmatprep.subr.mxu0 0.0
    %947 = vmatpush2.msra.mxu0 0.0
    %948 = vmatprep.subr.mxu0 0.0
    %949 = vmatpush2.msra.mxu0 0.0
    %950 = vmatprep.mubr.f32.mxu0 0.0
    %951 = vmatmul.mubr.f32.gmra.mxu0 %v855
    %v952 = vpop.f32.mrf.mxu0
    %v953 = vadd.f32 %v884, %v952
    %v954 = vpop.f32.mrf.mxu0
    %955 = vmatprep.mubr.f32.mxu0 0.0
    %956 = vmatmul.mubr.f32.gmra.mxu0 %v856
    %v957 = vpop.f32.mrf.mxu0
    %v958 = vadd.f32 %v884, %v957
    %v959 = vpop.f32.mrf.mxu0
    %960 = vmatprep.mubr.f32.mxu0 0.0
    %961 = vmatmul.mubr.f32.gmra.mxu0 %v857
    %v962 = vpop.f32.mrf.mxu0
    %v963 = vadd.f32 %v884, %v962
    %v964 = vpop.f32.mrf.mxu0
    %965 = vmatprep.mubr.f32.mxu0 0.0
    %966 = vmatmul.mubr.f32.gmra.mxu0 %v858
    %v967 = vpop.f32.mrf.mxu0
    %v968 = vadd.f32 %v884, %v967
    %v969 = vpop.f32.mrf.mxu0
    %970 = vmatprep.mubr.f32.mxu0 0.0
    %971 = vmatmul.mubr.f32.gmra.mxu0 %v859
    %v972 = vpop.f32.mrf.mxu0
    %v973 = vadd.f32 %v884, %v972
    %v974 = vpop.f32.mrf.mxu0
    %975 = vmatprep.mubr.f32.mxu0 0.0
    %976 = vmatmul.mubr.f32.gmra.mxu0 %v860
    %v977 = vpop.f32.mrf.mxu0
    %v978 = vadd.f32 %v884, %v977
    %v979 = vpop.f32.mrf.mxu0
    %980 = vmatprep.mubr.f32.mxu0 0.0
    %981 = vmatmul.mubr.f32.gmra.mxu0 %v861
    %v982 = vpop.f32.mrf.mxu0
    %v983 = vadd.f32 %v884, %v982
    %v984 = vpop.f32.mrf.mxu0
    %985 = vmatprep.mubr.f32.mxu0 0.0
    %986 = vmatmul.mubr.f32.gmra.mxu0 %v862
    %v987 = vpop.f32.mrf.mxu0
    %v988 = vadd.f32 %v884, %v987
    %v989 = vpop.f32.mrf.mxu0
    %990 = vdwg.mxu0
    %991 = vst [vmem:[#allocation12] sm:$0xff] %v953
    %992 = vst [vmem:[#allocation12 + $0x8] sm:$0xff] %v958
    %993 = vst [vmem:[#allocation12 + $0x10] sm:$0xff] %v963
    %994 = vst [vmem:[#allocation12 + $0x18] sm:$0xff] %v968
    %995 = vst [vmem:[#allocation12 + $0x20] sm:$0xff] %v973
    %996 = vst [vmem:[#allocation12 + $0x28] sm:$0xff] %v978
    %997 = vst [vmem:[#allocation12 + $0x30] sm:$0xff] %v983
    %998 = vst [vmem:[#allocation12 + $0x38] sm:$0xff] %v988
    // Predicated region
    $region46: #{tpu_custom_call.1} parent=1 // pred_check
      _
    $region47: #{tpu_custom_call.1} parent=1 // pred_check_branch
      %1000 = sbr.rel (0) target = $region49
    $region48: #{tpu_custom_call.1} parent=1 // pred_region
      %s1002 = ssub.s32 1024, 1024
      %1003 = vsyncadd [#allocation6], %s1002
      %s1004 = sshll.u32 [#allocation12], 4
      %s1005 = int_to_ptr.vmem [resolvable:$true] %s1004
      %1010 = dma.vmem_to_hbm [thread:$0]  %s1005, 1024, %s6, [#allocation6], 128, 128, 8
    $region49: #{tpu_custom_call.1} parent=1 // pred_fallthru
      _
    // Predicated region
    $region50: #{tpu_custom_call.1} parent=1 // pred_check
      _
    $region51: #{tpu_custom_call.1} parent=1 // pred_check_branch
      %1012 = sbr.rel (0) target = $region53
    $region52: #{tpu_custom_call.1} parent=1 // pred_region
      %s1014 = ssub.s32 1024, 1024
      %1015 = vsyncadd [#allocation14], %s1014
      %s1016 = sshll.u32 [#allocation13], 4
      %s1017 = int_to_ptr.vmem [resolvable:$true] %s1016
      %1022 = dma.vmem_to_hbm [thread:$0]  %s1017, 1024, %s7, [#allocation14], 128, 128, 8
    $region53: #{tpu_custom_call.1} parent=1 // pred_fallthru
      _
    // Predicated region
    $region54: #{tpu_custom_call.1} parent=1 // pred_check
      _
    $region55: #{tpu_custom_call.1} parent=1 // pred_check_branch
      %1024 = sbr.rel (0) target = $region57
    $region56: #{tpu_custom_call.1} parent=1 // pred_region
      %1025 = dma.done [#allocation6], 1024
    $region57: #{tpu_custom_call.1} parent=1 // pred_fallthru
      _
    // Predicated region
    $region58: #{tpu_custom_call.1} parent=1 // pred_check
      _
    $region59: #{tpu_custom_call.1} parent=1 // pred_check_branch
      %1027 = sbr.rel (0) target = $region61
    $region60: #{tpu_custom_call.1} parent=1 // pred_region
      %1028 = dma.done [#allocation14], 1024
    $region61: #{tpu_custom_call.1} parent=1 // pred_fallthru
      _
    %1029 = vsyncpa [#allocation5], 1
    %1030 = vsyncpa [#allocation8], 1
    %1031 = vsyncpa [#allocation11], 1
    %1032 = vsyncpa [#allocation6], 1
    %1033 = vsyncpa [#allocation14], 1

</llo_original>
